<compile_context>
chip_gen: v7x
topology: tpu7x:2x2x1
jax: 0.10.0
libtpu: 0.0.40
codegen_flags: <defaults>
</compile_context>

<pallas_src>
import jax
import jax.numpy as jnp
from jax.experimental import pallas as pl
from jax.experimental.pallas import tpu as pltpu


# ----------------------------- Pallas kernel ------------------------------- #

def _fused_forward_kernel(x_ref, wT_ref, b_ref, sT_ref, o_ref):
    """One batch element: out = (W_fused^T @ x) @ S^T + b.

    x_ref : (1, Cin, H*W)       compute dtype (bf16/f32)
    wT_ref: (C_pad, Cin)        compute dtype   (labels padded to mult. of 8)
    b_ref : (C_pad, 1)          f32
    sT_ref: (H*W, H*W)          compute dtype
    o_ref : (1, C_pad, H*W)     f32
    """
    # Channel contraction first (Cin -> C_pad) keeps the big spatial matmul
    # narrow; both matmuls are lane-dense (last dim = H*W) with f32 accumulate.
    y = jnp.dot(wT_ref[...], x_ref[0], preferred_element_type=jnp.float32)
    y = y.astype(sT_ref.dtype)
    out = jnp.dot(y, sT_ref[...], preferred_element_type=jnp.float32)
    o_ref[0] = (out + b_ref[...]).astype(o_ref.dtype)


def fused_forward(x_flat, wT, b, sT):
    """x_flat: (N, Cin, H*W) -> logits (N, C_pad, H*W), f32."""
    N, Cin, HW = x_flat.shape
    C_pad = wT.shape[0]
    return pl.pallas_call(
        _fused_forward_kernel,
        out_shape=jax.ShapeDtypeStruct((N, C_pad, HW), jnp.float32),
        grid_spec=pltpu.PrefetchScalarGridSpec(
            num_scalar_prefetch=0,
            grid=(N,),
            in_specs=[
                pl.BlockSpec((1, Cin, HW), lambda n: (n, 0, 0)),
                # Weights / bias / spatial operator: same block every step, so
                # Pallas keeps them resident in VMEM across the batch grid.
                pl.BlockSpec((C_pad, Cin), lambda n: (0, 0)),
                pl.BlockSpec((C_pad, 1), lambda n: (0, 0)),
                pl.BlockSpec((HW, HW), lambda n: (0, 0)),
            ],
            out_specs=pl.BlockSpec((1, C_pad, HW), lambda n: (n, 0, 0)),
        ),
        compiler_params=pltpu.CompilerParams(
            dimension_semantics=("parallel",)),
    )(x_flat, wT, b, sT)


# ----------------------- host-side operator construction ------------------- #

def _interp_matrix(out_size, in_size):
    """Bilinear weights matching F.interpolate(align_corners=False): (out, in)."""
    d = jnp.arange(out_size, dtype=jnp.float32)
    scale = in_size / out_size
    src = jnp.maximum((d + 0.5) * scale - 0.5, 0.0)
    i0 = jnp.minimum(jnp.floor(src).astype(jnp.int32), in_size - 1)
    i1 = jnp.minimum(i0 + 1, in_size - 1)
    frac = src - i0.astype(jnp.float32)
    e0 = jax.nn.one_hot(i0, in_size, dtype=jnp.float32)
    e1 = jax.nn.one_hot(i1, in_size, dtype=jnp.float32)
    return e0 * (1.0 - frac)[:, None] + e1 * frac[:, None]


def _pool_matrix(out_size, ds):
    """Average pool (kernel=stride=ds) as an (out, out*ds) matrix."""
    rows = jnp.arange(out_size, dtype=jnp.int32)[:, None]
    cols = jnp.arange(out_size * ds, dtype=jnp.int32)[None, :]
    return jnp.where(cols // ds == rows, 1.0 / ds, 0.0).astype(jnp.float32)


# ------------------------------ Model wrapper ------------------------------ #

class JointSegmentationModelPallas:
    """JAX/Pallas re-implementation of JointSegmentationModel.forward (fused)."""

    def __init__(self, key, composite_in_channels=11, num_labels=5,
                 downsample=4, compute_dtype=jnp.bfloat16):
        k1, k2, k3, k4 = jax.random.split(key, 4)
        # input_adapter = nn.Conv2d(composite_in_channels, 3, kernel_size=1)
        # (PyTorch weight (3, Cin, 1, 1) stored here as (Cin, 3) matmul weight.)
        self.adapter_w = jax.random.normal(
            k1, (composite_in_channels, 3), jnp.float32) / jnp.sqrt(
                jnp.float32(composite_in_channels))
        self.adapter_b = jax.random.normal(k2, (1, 3), jnp.float32) * 0.01
        # TODO(synk): base_model is an external pretrained segmentation network
        # passed into __init__ (no architecture given in the module); replaced
        # by a synthetic stand-in (4x avg-pool + 1x1 head at 1/4 resolution)
        # which preserves the "coarse logits + bilinear upsample" contract.
        self.head_w = jax.random.normal(
            k3, (3, num_labels), jnp.float32) / jnp.sqrt(3.0)
        self.head_b = jax.random.normal(k4, (1, num_labels), jnp.float32) * 0.01

        self.num_labels = num_labels
        self.ds = downsample
        self.compute_dtype = compute_dtype

        # ---- fold adapter(1x1) and head(1x1) into one channel matmul + bias,
        #      padding the label axis up to a multiple of 8 sublanes so MXU
        #      results and output stores use full (8,128) tiles.
        c_pad = ((num_labels + 7) // 8) * 8
        self.c_pad = c_pad
        w_fused = self.adapter_w @ self.head_w                 # (Cin, num_labels)
        b_fused = self.adapter_b @ self.head_w + self.head_b   # (1, num_labels)
        wT = jnp.zeros((c_pad, composite_in_channels), jnp.float32)
        wT = wT.at[:num_labels, :].set(w_fused.T)
        b = jnp.zeros((c_pad, 1), jnp.float32)
        b = b.at[:num_labels, 0].set(b_fused.reshape(num_labels))
        self.wT = wT.astype(compute_dtype)                     # (C_pad, Cin)
        self.b = b                                             # (C_pad, 1) f32

        # (H, W) -> fused pool+bilinear spatial operator S^T (cached, built once)
        self._spatial_cache = {}

    def _spatial_operator_T(self, H, W):
        key = (H, W)
        if key not in self._spatial_cache:
            Hs, Ws = H // self.ds, W // self.ds
            m_r = _interp_matrix(H, Hs) @ _pool_matrix(Hs, self.ds)   # (H, H)
            m_c = _interp_matrix(W, Ws) @ _pool_matrix(Ws, self.ds)   # (W, W)
            # row-major vec: vec(M_R @ X @ M_C^T) = kron(M_R, M_C) @ vec(X)
            s = jnp.kron(m_r, m_c)                                    # (H*W, H*W)
            self._spatial_cache[key] = jnp.asarray(s.T, self.compute_dtype)
        return self._spatial_cache[key]

    def __call__(self, x_nchw):
        N, Cin, H, W = x_nchw.shape
        assert H % self.ds == 0 and W % self.ds == 0
        sT = self._spatial_operator_T(H, W)
        # contiguous reshape only -- no NCHW<->NHWC transposes anywhere
        x_flat = x_nchw.reshape(N, Cin, H * W).astype(self.compute_dtype)
        out = fused_forward(x_flat, self.wT, self.b, sT)    # (N, C_pad, H*W) f32
        out = out[:, :self.num_labels, :]                   # drop pad labels
        return out.reshape(N, self.num_labels, H, W)        # NCHW logits


# -------------------- pure-JAX unfused reference (self-check) -------------- #

def _reference_forward(model, x_nchw):
    N, Cin, H, W = x_nchw.shape
    ds = model.ds
    Hs, Ws = H // ds, W // ds
    hp = jax.lax.Precision.HIGHEST
    a = jnp.einsum('nchw,ck->nkhw', x_nchw, model.adapter_w, precision=hp)
    a = a + model.adapter_b.reshape(1, 3, 1, 1)
    pooled = a.reshape(N, 3, Hs, ds, Ws, ds).mean(axis=(3, 5))
    logits = jnp.einsum('nkhw,kc->nchw', pooled, model.head_w, precision=hp)
    logits = logits + model.head_b.reshape(1, model.num_labels, 1, 1)
    R = _interp_matrix(H, Hs)
    Cm = _interp_matrix(W, Ws)
    return jnp.einsum('ha,ncab,wb->nchw', R, logits, Cm, precision=hp)


# ---------------------------------- main ----------------------------------- #

if __name__ == "__main__":
    key = jax.random.PRNGKey(0)
    kx, kp = jax.random.split(key)
    # composite input: batch=2, 11 composite channels, 16x16 spatial (NCHW)
    x = jax.random.normal(kx, (2, 11, 16, 16), jnp.float32)
    model = JointSegmentationModelPallas(kp, composite_in_channels=11,
                                         num_labels=5, downsample=4,
                                         compute_dtype=jnp.bfloat16)
    out = model(x)
    jax.block_until_ready(out)
    assert out.shape == (2, 5, 16, 16), out.shape
    assert out.dtype == jnp.float32

    # fused-kernel vs. unfused pure-JAX chain (loose tol: bf16 compute path)
    ref = _reference_forward(model, x)
    err = float(jnp.max(jnp.abs(out - ref)))
    assert err < 1e-1, f"max abs err {err}"
    print("KERNEL_OK")
</pallas_src>

<mosaic_0001>
module attributes {stable_mosaic.version = 11 : i64} {
  func.func @_fused_forward_kernel(%arg0: i32, %arg1: memref<1x11x256xbf16, #tpu.memory_space<vmem>>, %arg2: memref<8x11xbf16, #tpu.memory_space<vmem>>, %arg3: memref<8x1xf32, #tpu.memory_space<vmem>>, %arg4: memref<256x256xbf16, #tpu.memory_space<vmem>>, %arg5: memref<1x8x256xf32, #tpu.memory_space<vmem>>) attributes {dimension_semantics = [#tpu.dimension_semantics<parallel>], iteration_bounds = array<i64: 2>, scalar_prefetch = 0 : i64, scratch_operands = 0 : i64, tpu.core_type = #tpu.core_type<tc>, window_params = [{transform_indices = @transform_0, window_bounds = array<i64: 1, 11, 256>}, {pipeline_mode = #tpu.pipeline_mode<synchronous>, transform_indices = @transform_1, window_bounds = array<i64: 8, 11>}, {pipeline_mode = #tpu.pipeline_mode<synchronous>, transform_indices = @transform_2, window_bounds = array<i64: 8, 1>}, {pipeline_mode = #tpu.pipeline_mode<synchronous>, transform_indices = @transform_3, window_bounds = array<i64: 256, 256>}, {transform_indices = @transform_4, window_bounds = array<i64: 1, 8, 256>}]} {
    %c0 = arith.constant 0 : index
    %c0_0 = arith.constant 0 : index
    %0 = vector.load %arg2[%c0, %c0_0] : memref<8x11xbf16, #tpu.memory_space<vmem>>, vector<8x11xbf16>
    %c0_1 = arith.constant 0 : index
    %c0_2 = arith.constant 0 : index
    %c0_3 = arith.constant 0 : index
    %1 = vector.load %arg1[%c0_1, %c0_2, %c0_3] : memref<1x11x256xbf16, #tpu.memory_space<vmem>>, vector<1x11x256xbf16>
    %2 = vector.shape_cast %1 : vector<1x11x256xbf16> to vector<11x256xbf16>
    %cst = arith.constant dense<0.000000e+00> : vector<8x256xf32>
    %3 = tpu.matmul %0, %2, %cst {dimension_numbers = #tpu.dot_dimension_numbers<[1], [0], [0], [1], [0, 0, 1, 1], [], []>} : vector<8x11xbf16>, vector<11x256xbf16>, vector<8x256xf32> -> vector<8x256xf32>
    %4 = arith.truncf %3 : vector<8x256xf32> to vector<8x256xbf16>
    %c0_4 = arith.constant 0 : index
    %c0_5 = arith.constant 0 : index
    %5 = vector.load %arg4[%c0_4, %c0_5] : memref<256x256xbf16, #tpu.memory_space<vmem>>, vector<256x256xbf16>
    %cst_6 = arith.constant dense<0.000000e+00> : vector<8x256xf32>
    %6 = tpu.matmul %4, %5, %cst_6 {dimension_numbers = #tpu.dot_dimension_numbers<[1], [0], [0], [1], [0, 0, 1, 1], [], []>} : vector<8x256xbf16>, vector<256x256xbf16>, vector<8x256xf32> -> vector<8x256xf32>
    %c0_7 = arith.constant 0 : index
    %c0_8 = arith.constant 0 : index
    %7 = vector.load %arg3[%c0_7, %c0_8] : memref<8x1xf32, #tpu.memory_space<vmem>>, vector<8x1xf32>
    %8 = vector.broadcast %7 : vector<8x1xf32> to vector<8x256xf32>
    %9 = arith.addf %6, %8 : vector<8x256xf32>
    %c0_9 = arith.constant 0 : index
    %c0_10 = arith.constant 0 : index
    %c0_11 = arith.constant 0 : index
    %10 = vector.load %arg5[%c0_9, %c0_10, %c0_11] : memref<1x8x256xf32, #tpu.memory_space<vmem>>, vector<1x8x256xf32>
    %11 = vector.shape_cast %10 : vector<1x8x256xf32> to vector<8x256xf32>
    %12 = vector.shape_cast %9 : vector<8x256xf32> to vector<1x8x256xf32>
    tpu.vector_store %arg5[%c0_9, %c0_10, %c0_11], %12 {strides = array<i32>} : memref<1x8x256xf32, #tpu.memory_space<vmem>>, vector<1x8x256xf32>,
    return
  }
  func.func @transform_0(%arg0: i32) -> (i32, i32, i32) {
    %c0_i32 = arith.constant 0 : i32
    %c0_i32_0 = arith.constant 0 : i32
    %c0_i32_1 = arith.constant 0 : i32
    return %arg0, %c0_i32, %c0_i32_0 : i32, i32, i32
  }
  func.func @transform_1(%arg0: i32) -> (i32, i32) {
    %c0_i32 = arith.constant 0 : i32
    %c0_i32_0 = arith.constant 0 : i32
    %c0_i32_1 = arith.constant 0 : i32
    return %c0_i32, %c0_i32_0 : i32, i32
  }
  func.func @transform_2(%arg0: i32) -> (i32, i32) {
    %c0_i32 = arith.constant 0 : i32
    %c0_i32_0 = arith.constant 0 : i32
    %c0_i32_1 = arith.constant 0 : i32
    return %c0_i32, %c0_i32_0 : i32, i32
  }
  func.func @transform_3(%arg0: i32) -> (i32, i32) {
    %c0_i32 = arith.constant 0 : i32
    %c0_i32_0 = arith.constant 0 : i32
    %c0_i32_1 = arith.constant 0 : i32
    return %c0_i32, %c0_i32_0 : i32, i32
  }
  func.func @transform_4(%arg0: i32) -> (i32, i32, i32) {
    %c0_i32 = arith.constant 0 : i32
    %c0_i32_0 = arith.constant 0 : i32
    %c0_i32_1 = arith.constant 0 : i32
    return %arg0, %c0_i32, %c0_i32_0 : i32, i32, i32
  }
}

</mosaic_0001>

<llo_original>
// kernel: tpu_custom_call.1
$region0: #{tpu_custom_call.1}
  #allocation0 [shape = 'u32[]', space=smem, size = 0x4, offset = 0x4, fixed_abs, tag = 'smem constant byte address 0x4 - core index']
  #allocation1 [shape = 'u32[144,128]{1,0:T(1,128)}', space=vmem, size = 0x12000, scoped, tag = 'internal scratch']
  %s0 = inlined_call_operand.vmem [shape: bf16[2,11,256], index: 0, kind: input, shape index: {}]
  %s1 = inlined_call_operand.vmem [shape: bf16[8,11], index: 1, kind: input, shape index: {}]
  %s2 = inlined_call_operand.vmem [shape: f32[8,1], index: 2, kind: input, shape index: {}]
  %s3 = inlined_call_operand.hbm [shape: bf16[256,256], index: 3, kind: input, shape index: {}]
  %s4 = inlined_call_operand.hbm [shape: f32[2,8,256], index: 4, kind: output, shape index: {}]
  %s5 = sld [smem:[#allocation0]]
  $region53: #{tpu_custom_call.1} parent=0
    _
  %s7 = ssub.s32 1, %s5
  %s8 = scalar_select 0, %s7, %s5
  $region1: #{tpu_custom_call.1} parent=0
    #allocation2 [shape = 'u8[131072]{0}', space=vmem, size = 0x20000, scoped, tag = 'input window, operand 3, single buffered']
    #allocation3 [shape = 's32[2]{0}', space=sflag, size = 0x8, scoped, tag = 'scoped memory for tpu_custom_call.1']
    #allocation4 [shape = 's32[2]{0}', space=sflag, size = 0x8, scoped, tag = 'scoped memory for tpu_custom_call.1']
    #allocation5 [shape = 'u8[16384]{0}', space=vmem, size = 0x4000, scoped, tag = 'output window, operand 0']
    %9 = vsyncpa [#allocation3], 0
    %10 = vsyncpa [#allocation4], 0
    %s11 = scalar_lea.sflag [#allocation4], 1
    %12 = vsyncpa %s11, 0
    loop: start=0, step=1, limit=4
    $region2: #{tpu_custom_call.1} parent=1 // loop_pre_header
      _
    $region3: #{tpu_custom_call.1} parent=1 // loop_header
      %s14 = sphi 0, %s18
      %p15 = scmp.ge.s32.totalorder %s14, 4
      %s24 = sphi 0, %s26
      %s27 = sphi 0, %s24
      %s28 = sphi 0, %s27
      %s44 = sphi 0, %s28
      %s48 = sphi 0, %s48
      %s50 = sphi 0, %s48
      %s51 = sphi 0, %s50
      %s65 = sphi 0, %s51
      %s69 = sphi 0, %s69
      %s71 = sphi 0, %s69
      %s72 = sphi 0, %s71
      %s86 = sphi 0, %s72
      %s90 = sphi 0, %s90
      %s92 = sphi 0, %s90
      %s93 = sphi 0, %s92
      %s107 = sphi 0, %s93
      %s113 = sphi 0, %s115
      %s116 = sphi 0, %s113
      %s117 = sphi 0, %s116
      %s133 = sphi 0, %s117
    $region4: #{tpu_custom_call.1} parent=1 // loop_header_branch
      %17 = sbr.rel (%p15) target = $region8
    $region5: #{tpu_custom_call.1} parent=1 // loop_body
      %s19 = ssub.s32 %s14, 1
      %s20 = ssub.s32 %s14, 2
      %s21 = sadd.s32 %s14, 1
      %s22 = ssub.s32 %s14, %s21
      %p23 = scmp.eq.s32.totalorder %s22, 0
      %s25 = sadd.s32 %s24, 1
      %s26 = scalar_select %p23, %s24, %s25
      %p29 = pneg %p23
      %p30 = scmp.eq.s32.totalorder %s14, 1
      %p31 = por %p29, %p30
      %p32 = scmp.ne.s32.totalorder %s24, %s27
      %p33 = scmp.eq.s32.totalorder %s14, 0
      %p34 = por %p32, %p33
      %p35 = scmp.ne.s32.totalorder %s24, %s27
      %p36 = scmp.eq.s32.totalorder %s19, 1
      %p37 = por %p35, %p36
      %p38 = scmp.ne.s32.totalorder %s27, %s28
      %p39 = scmp.eq.s32.totalorder %s19, 0
      %p40 = por %p38, %p39
      %p41 = scmp.ne.s32.totalorder %s27, %s28
      %p42 = scmp.eq.s32.totalorder %s20, 1
      %p43 = por %p41, %p42
      %p45 = scmp.ne.s32.totalorder %s28, %s44
      %p46 = scmp.eq.s32.totalorder %s20, 0
      %p47 = por %p45, %p46
      %s49 = sadd.s32 %s48, 1
      %p52 = scmp.eq.s32.totalorder %s14, 1
      %p53 = scmp.ne.s32.totalorder %s48, %s50
      %p54 = scmp.eq.s32.totalorder %s14, 0
      %p55 = por %p53, %p54
      %p56 = scmp.ne.s32.totalorder %s48, %s50
      %p57 = scmp.eq.s32.totalorder %s19, 1
      %p58 = por %p56, %p57
      %p59 = scmp.ne.s32.totalorder %s50, %s51
      %p60 = scmp.eq.s32.totalorder %s19, 0
      %p61 = por %p59, %p60
      %p62 = scmp.ne.s32.totalorder %s50, %s51
      %p63 = scmp.eq.s32.totalorder %s20, 1
      %p64 = por %p62, %p63
      %p66 = scmp.ne.s32.totalorder %s51, %s65
      %p67 = scmp.eq.s32.totalorder %s20, 0
      %p68 = por %p66, %p67
      %s70 = sadd.s32 %s69, 1
      %p73 = scmp.eq.s32.totalorder %s14, 1
      %p74 = scmp.ne.s32.totalorder %s69, %s71
      %p75 = scmp.eq.s32.totalorder %s14, 0
      %p76 = por %p74, %p75
      %p77 = scmp.ne.s32.totalorder %s69, %s71
      %p78 = scmp.eq.s32.totalorder %s19, 1
      %p79 = por %p77, %p78
      %p80 = scmp.ne.s32.totalorder %s71, %s72
      %p81 = scmp.eq.s32.totalorder %s19, 0
      %p82 = por %p80, %p81
      %p83 = scmp.ne.s32.totalorder %s71, %s72
      %p84 = scmp.eq.s32.totalorder %s20, 1
      %p85 = por %p83, %p84
      %p87 = scmp.ne.s32.totalorder %s72, %s86
      %p88 = scmp.eq.s32.totalorder %s20, 0
      %p89 = por %p87, %p88
      %s91 = sadd.s32 %s90, 1
      %p94 = scmp.eq.s32.totalorder %s14, 1
      %p95 = scmp.ne.s32.totalorder %s90, %s92
      %p96 = scmp.eq.s32.totalorder %s14, 0
      %p97 = por %p95, %p96
      %p98 = scmp.ne.s32.totalorder %s90, %s92
      %p99 = scmp.eq.s32.totalorder %s19, 1
      %p100 = por %p98, %p99
      %p101 = scmp.ne.s32.totalorder %s92, %s93
      %p102 = scmp.eq.s32.totalorder %s19, 0
      %p103 = por %p101, %p102
      %p104 = scmp.ne.s32.totalorder %s92, %s93
      %p105 = scmp.eq.s32.totalorder %s20, 1
      %p106 = por %p104, %p105
      %p108 = scmp.ne.s32.totalorder %s93, %s107
      %p109 = scmp.eq.s32.totalorder %s20, 0
      %p110 = por %p108, %p109
      %s111 = ssub.s32 %s14, %s21
      %p112 = scmp.eq.s32.totalorder %s111, 0
      %s114 = sadd.s32 %s113, 1
      %s115 = scalar_select %p112, %s113, %s114
      %p118 = pneg %p112
      %p119 = scmp.eq.s32.totalorder %s14, 1
      %p120 = por %p118, %p119
      %p121 = scmp.ne.s32.totalorder %s113, %s116
      %p122 = scmp.eq.s32.totalorder %s14, 0
      %p123 = por %p121, %p122
      %p124 = scmp.ne.s32.totalorder %s113, %s116
      %p125 = scmp.eq.s32.totalorder %s19, 1
      %p126 = por %p124, %p125
      %p127 = scmp.ne.s32.totalorder %s116, %s117
      %p128 = scmp.eq.s32.totalorder %s19, 0
      %p129 = por %p127, %p128
      %p130 = scmp.ne.s32.totalorder %s116, %s117
      %p131 = scmp.eq.s32.totalorder %s20, 1
      %p132 = por %p130, %p131
      %p134 = scmp.ne.s32.totalorder %s117, %s133
      %p135 = scmp.eq.s32.totalorder %s20, 0
      %p136 = por %p134, %p135
      %p137 = scmp.le.s32.totalorder 1, %s14
      %p138 = scmp.lt.s32.totalorder %s14, 3
      %p139 = pnand %p137, %p138
      %p140 = pneg %p139
      // Predicated region
      $region9: #{tpu_custom_call.1} parent=5 // pred_check
        _
      $region10: #{tpu_custom_call.1} parent=5 // pred_check_branch
        %142 = sbr.rel (%p139) target = $region12
      $region11: #{tpu_custom_call.1} parent=5 // pred_region
        %s143 = ssub.s32 %s14, 1
        // Predicated region
        $region13: #{tpu_custom_call.1} parent=11 // pred_check
          %p144 = pneg %p61
        $region14: #{tpu_custom_call.1} parent=11 // pred_check_branch
          %146 = sbr.rel (%p144) target = $region16
        $region15: #{tpu_custom_call.1} parent=11 // pred_region
          _
        $region16: #{tpu_custom_call.1} parent=11 // pred_fallthru
          _
        // Predicated region
        $region17: #{tpu_custom_call.1} parent=11 // pred_check
          %p147 = pneg %p82
        $region18: #{tpu_custom_call.1} parent=11 // pred_check_branch
          %149 = sbr.rel (%p147) target = $region20
        $region19: #{tpu_custom_call.1} parent=11 // pred_region
          _
        $region20: #{tpu_custom_call.1} parent=11 // pred_fallthru
          _
        // Predicated region
        $region21: #{tpu_custom_call.1} parent=11 // pred_check
          %p150 = pneg %p103
        $region22: #{tpu_custom_call.1} parent=11 // pred_check_branch
          %152 = sbr.rel (%p150) target = $region24
        $region23: #{tpu_custom_call.1} parent=11 // pred_region
          %s154 = ssub.s32 4096, 4096
          %155 = vsyncadd [#allocation3], %s154
          %s156 = sshll.u32 [#allocation2], 4
          %s157 = int_to_ptr.vmem [resolvable:$true] %s156
          %162 = dma.hbm_to_vmem [thread:$0]  %s3, 4096, %s157, [#allocation3], 128, 128, 8
        $region24: #{tpu_custom_call.1} parent=11 // pred_fallthru
          _
      $region12: #{tpu_custom_call.1} parent=5 // pred_fallthru
        _
      %p163 = scmp.lt.s32.totalorder %s14, 2
      // Predicated region
      $region25: #{tpu_custom_call.1} parent=5 // pred_check
        %p164 = pneg %p163
      $region26: #{tpu_custom_call.1} parent=5 // pred_check_branch
        %166 = sbr.rel (%p164) target = $region28
      $region27: #{tpu_custom_call.1} parent=5 // pred_region
        // Predicated region
        $region29: #{tpu_custom_call.1} parent=27 // pred_check
          %p167 = pneg %p34
        $region30: #{tpu_custom_call.1} parent=27 // pred_check_branch
          %169 = sbr.rel (%p167) target = $region32
        $region31: #{tpu_custom_call.1} parent=27 // pred_region
          %p170 = scmp.lt.s32.totalorder %s14, 1
          %s171 = scalar_select %p170, %s14, 1
          %s172 = smul.addr %s171, 4
          %s173 = smul.addr %s172, 4
          %s174 = scalar_lea.vmem %s0, %s173
        $region32: #{tpu_custom_call.1} parent=27 // pred_fallthru
          _
      $region28: #{tpu_custom_call.1} parent=5 // pred_fallthru
        _
      %p175 = scmp.le.s32.totalorder 1, %s14
      %p176 = scmp.lt.s32.totalorder %s14, 3
      %p177 = pnand %p175, %p176
      %p178 = pneg %p177
      // Predicated region
      $region33: #{tpu_custom_call.1} parent=5 // pred_check
        _
      $region34: #{tpu_custom_call.1} parent=5 // pred_check_branch
        %180 = sbr.rel (%p177) target = $region36
      $region35: #{tpu_custom_call.1} parent=5 // pred_region
        %s181 = ssub.s32 %s14, 1
        // Predicated region
        $region37: #{tpu_custom_call.1} parent=35 // pred_check
          %p182 = pneg %p103
        $region38: #{tpu_custom_call.1} parent=35 // pred_check_branch
          %184 = sbr.rel (%p182) target = $region40
        $region39: #{tpu_custom_call.1} parent=35 // pred_region
          %185 = dma.done [#allocation3], 4096
        $region40: #{tpu_custom_call.1} parent=35 // pred_fallthru
          _
        %p186 = scmp.lt.s32.totalorder %s19, 1
        %s187 = scalar_select %p186, %s19, 1
        %s188 = smul.addr %s187, 4
        %s189 = smul.addr %s188, 4
        %s190 = scalar_lea.vmem %s0, %s189
        %p191 = pneg %p40
        %p192 = pneg %p37
        %p193 = pneg %p61
        %p194 = pneg %p58
        %p195 = pneg %p82
        %p196 = pneg %p79
        %p197 = pneg %p103
        %p198 = pneg %p100
        %p199 = pneg %p129
        %p200 = pneg %p126
        %s201 = sand.u32 %s116, 1
        %s202 = scalar_lea.sflag [#allocation4], %s201
        %s203 = sand.u32 %s116, 1
        %s204 = smul.addr %s203, 16
        %s205 = scalar_lea.vmem [#allocation5], %s204
        %p206 = scmp.lt.s32.totalorder %s19, 1
        %s207 = scalar_select %p206, %s19, 1
        %s208 = smul.addr %s207, 4
        %s209 = smul.addr %s208, 4
        %s210 = scalar_lea.vmem %s0, %s209
        %v212 = vld [vmem:[%s1] sm:$0xf]
        %v213 = vld [vmem:[%s210] sm:$0xff]
        %v214 = vld [vmem:[%s210 + $0x8] sm:$0x33]
        %v217 = vunpack.c.l.b16 %v213
        %v218 = vunpack.c.h.b16 %v213
        %v219 = vunpack.c.l.b16 %v214
        %v220 = vunpack.c.h.b16 %v214
        %v221 = vpack.c.b16 %v219, %v217
        %v222 = vpack.c.b16 %v220, %v218
        %vm223 = vcmask 89088
        %v225 = vsel %vm223, %v212, 0
        %vm227 = vcmask 1044480
        %vm228 = vcmask 1045504
        %v229 = vsel %vm227, 4294967295, 65535
        %v230 = vsel %vm228, %v229, 0
        %v232 = vand.u32 %v221, %v230
        %v235 = vand.u32 %v222, %v230
        %237 = vmatprep.subr.bf16.mxu0 %v235
        %238 = vmatpush1.bf16.msra.mxu0 %v232
        %239 = vmatprep.subr.bf16.mxu0 0
        %240 = vmatpush1.bf16.msra.mxu0 0
        %241 = vmatprep.subr.bf16.mxu0 0
        %242 = vmatpush1.bf16.msra.mxu0 0
        %243 = vmatprep.subr.bf16.mxu0 0
        %244 = vmatpush1.bf16.msra.mxu0 0
        %245 = vmatprep.subr.bf16.mxu0 0
        %246 = vmatpush1.bf16.msra.mxu0 0
        %247 = vmatprep.subr.bf16.mxu0 0
        %248 = vmatpush1.bf16.msra.mxu0 0
        %249 = vmatprep.subr.bf16.mxu0 0
        %250 = vmatpush1.bf16.msra.mxu0 0
        %251 = vmatprep.subr.bf16.mxu0 0
        %252 = vmatpush1.bf16.msra.mxu0 0
        %253 = vmatprep.subr.bf16.mxu0 0
        %254 = vmatpush1.bf16.msra.mxu0 0
        %255 = vmatprep.subr.bf16.mxu0 0
        %256 = vmatpush1.bf16.msra.mxu0 0
        %257 = vmatprep.subr.bf16.mxu0 0
        %258 = vmatpush1.bf16.msra.mxu0 0
        %259 = vmatprep.subr.bf16.mxu0 0
        %260 = vmatpush1.bf16.msra.mxu0 0
        %261 = vmatprep.subr.bf16.mxu0 0
        %262 = vmatpush1.bf16.msra.mxu0 0
        %263 = vmatprep.subr.bf16.mxu0 0
        %264 = vmatpush1.bf16.msra.mxu0 0
        %265 = vmatprep.subr.bf16.mxu0 0
        %266 = vmatpush1.bf16.msra.mxu0 0
        %267 = vmatprep.subr.bf16.mxu0 0
        %268 = vmatpush1.bf16.msra.mxu0 0
        %269 = vmatprep.mubr.bf16.mxu0 0
        %270 = vmatmul.mubr.bf16.gmra.mrb[0].mxu0 %v225
        %v271 = vpop.f32.mrb[0].mxu0
        %v272 = vadd.f32 0.0, %v271
        %v273 = vpop.f32.mrb[0].mxu0
        %v274 = vadd.f32 0.0, %v273
        %v275 = vpop.f32.mrb[0].mxu0
        %v276 = vpop.f32.mrb[0].mxu0
        %277 = vdwg.mxu0
        %v278 = vpack.c.bf16 %v272, %v272
        %v279 = vpack.c.bf16 %v274, %v274
        %v280 = vld [vmem:[#allocation2] sm:$0xff]
        %v281 = vld [vmem:[#allocation2 + $0x8] sm:$0xff]
        %v282 = vld [vmem:[#allocation2 + $0x10] sm:$0xff]
        %v283 = vld [vmem:[#allocation2 + $0x18] sm:$0xff]
        %v284 = vld [vmem:[#allocation2 + $0x20] sm:$0xff]
        %v285 = vld [vmem:[#allocation2 + $0x28] sm:$0xff]
        %v286 = vld [vmem:[#allocation2 + $0x30] sm:$0xff]
        %v287 = vld [vmem:[#allocation2 + $0x38] sm:$0xff]
        %v288 = vld [vmem:[#allocation2 + $0x40] sm:$0xff]
        %v289 = vld [vmem:[#allocation2 + $0x48] sm:$0xff]
        %v290 = vld [vmem:[#allocation2 + $0x50] sm:$0xff]
        %v291 = vld [vmem:[#allocation2 + $0x58] sm:$0xff]
        %v292 = vld [vmem:[#allocation2 + $0x60] sm:$0xff]
        %v293 = vld [vmem:[#allocation2 + $0x68] sm:$0xff]
        %v294 = vld [vmem:[#allocation2 + $0x70] sm:$0xff]
        %v295 = vld [vmem:[#allocation2 + $0x78] sm:$0xff]
        %v296 = vld [vmem:[#allocation2 + $0x80] sm:$0xff]
        %v297 = vld [vmem:[#allocation2 + $0x88] sm:$0xff]
        %v298 = vld [vmem:[#allocation2 + $0x90] sm:$0xff]
        %v299 = vld [vmem:[#allocation2 + $0x98] sm:$0xff]
        %v300 = vld [vmem:[#allocation2 + $0xa0] sm:$0xff]
        %v301 = vld [vmem:[#allocation2 + $0xa8] sm:$0xff]
        %v302 = vld [vmem:[#allocation2 + $0xb0] sm:$0xff]
        %v303 = vld [vmem:[#allocation2 + $0xb8] sm:$0xff]
        %v304 = vld [vmem:[#allocation2 + $0xc0] sm:$0xff]
        %v305 = vld [vmem:[#allocation2 + $0xc8] sm:$0xff]
        %v306 = vld [vmem:[#allocation2 + $0xd0] sm:$0xff]
        %v307 = vld [vmem:[#allocation2 + $0xd8] sm:$0xff]
        %v308 = vld [vmem:[#allocation2 + $0xe0] sm:$0xff]
        %v309 = vld [vmem:[#allocation2 + $0xe8] sm:$0xff]
        %v310 = vld [vmem:[#allocation2 + $0xf0] sm:$0xff]
        %v311 = vld [vmem:[#allocation2 + $0xf8] sm:$0xff]
        %v312 = vld [vmem:[%s2] sm:$0xff]
        %314 = vset.pattern.permute.xlu0 0
        %315 = vperm.xlu0 %314, %v312
        %v316 = vpop.permute.xlu0 %315
        %v350 = vunpack.c.l.b16 %v280
        %v351 = vunpack.c.h.b16 %v280
        %v352 = vunpack.c.l.b16 %v281
        %v353 = vunpack.c.h.b16 %v281
        %v354 = vunpack.c.l.b16 %v282
        %v355 = vunpack.c.h.b16 %v282
        %v356 = vunpack.c.l.b16 %v283
        %v357 = vunpack.c.h.b16 %v283
        %v358 = vunpack.c.l.b16 %v284
        %v359 = vunpack.c.h.b16 %v284
        %v360 = vunpack.c.l.b16 %v285
        %v361 = vunpack.c.h.b16 %v285
        %v362 = vunpack.c.l.b16 %v286
        %v363 = vunpack.c.h.b16 %v286
        %v364 = vunpack.c.l.b16 %v287
        %v365 = vunpack.c.h.b16 %v287
        %v366 = vunpack.c.l.b16 %v288
        %v367 = vunpack.c.h.b16 %v288
        %v368 = vunpack.c.l.b16 %v289
        %v369 = vunpack.c.h.b16 %v289
        %v370 = vunpack.c.l.b16 %v290
        %v371 = vunpack.c.h.b16 %v290
        %v372 = vunpack.c.l.b16 %v291
        %v373 = vunpack.c.h.b16 %v291
        %v374 = vunpack.c.l.b16 %v292
        %v375 = vunpack.c.h.b16 %v292
        %v376 = vunpack.c.l.b16 %v293
        %v377 = vunpack.c.h.b16 %v293
        %v378 = vunpack.c.l.b16 %v294
        %v379 = vunpack.c.h.b16 %v294
        %v380 = vunpack.c.l.b16 %v295
        %v381 = vunpack.c.h.b16 %v295
        %v382 = vunpack.c.l.b16 %v296
        %v383 = vunpack.c.h.b16 %v296
        %v384 = vunpack.c.l.b16 %v297
        %v385 = vunpack.c.h.b16 %v297
        %v386 = vunpack.c.l.b16 %v298
        %v387 = vunpack.c.h.b16 %v298
        %v388 = vunpack.c.l.b16 %v299
        %v389 = vunpack.c.h.b16 %v299
        %v390 = vunpack.c.l.b16 %v300
        %v391 = vunpack.c.h.b16 %v300
        %v392 = vunpack.c.l.b16 %v301
        %v393 = vunpack.c.h.b16 %v301
        %v394 = vunpack.c.l.b16 %v302
        %v395 = vunpack.c.h.b16 %v302
        %v396 = vunpack.c.l.b16 %v303
        %v397 = vunpack.c.h.b16 %v303
        %v398 = vunpack.c.l.b16 %v304
        %v399 = vunpack.c.h.b16 %v304
        %v400 = vunpack.c.l.b16 %v305
        %v401 = vunpack.c.h.b16 %v305
        %v402 = vunpack.c.l.b16 %v306
        %v403 = vunpack.c.h.b16 %v306
        %v404 = vunpack.c.l.b16 %v307
        %v405 = vunpack.c.h.b16 %v307
        %v406 = vunpack.c.l.b16 %v308
        %v407 = vunpack.c.h.b16 %v308
        %v408 = vunpack.c.l.b16 %v309
        %v409 = vunpack.c.h.b16 %v309
        %v410 = vunpack.c.l.b16 %v310
        %v411 = vunpack.c.h.b16 %v310
        %v412 = vunpack.c.l.b16 %v311
        %v413 = vunpack.c.h.b16 %v311
        %v414 = vpack.c.b16 %v352, %v350
        %v415 = vpack.c.b16 %v353, %v351
        %v416 = vpack.c.b16 %v356, %v354
        %v417 = vpack.c.b16 %v357, %v355
        %v418 = vpack.c.b16 %v360, %v358
        %v419 = vpack.c.b16 %v361, %v359
        %v420 = vpack.c.b16 %v364, %v362
        %v421 = vpack.c.b16 %v365, %v363
        %v422 = vpack.c.b16 %v368, %v366
        %v423 = vpack.c.b16 %v369, %v367
        %v424 = vpack.c.b16 %v372, %v370
        %v425 = vpack.c.b16 %v373, %v371
        %v426 = vpack.c.b16 %v376, %v374
        %v427 = vpack.c.b16 %v377, %v375
        %v428 = vpack.c.b16 %v380, %v378
        %v429 = vpack.c.b16 %v381, %v379
        %v430 = vpack.c.b16 %v384, %v382
        %v431 = vpack.c.b16 %v385, %v383
        %v432 = vpack.c.b16 %v388, %v386
        %v433 = vpack.c.b16 %v389, %v387
        %v434 = vpack.c.b16 %v392, %v390
        %v435 = vpack.c.b16 %v393, %v391
        %v436 = vpack.c.b16 %v396, %v394
        %v437 = vpack.c.b16 %v397, %v395
        %v438 = vpack.c.b16 %v400, %v398
        %v439 = vpack.c.b16 %v401, %v399
        %v440 = vpack.c.b16 %v404, %v402
        %v441 = vpack.c.b16 %v405, %v403
        %v442 = vpack.c.b16 %v408, %v406
        %v443 = vpack.c.b16 %v409, %v407
        %v444 = vpack.c.b16 %v412, %v410
        %v445 = vpack.c.b16 %v413, %v411
        %478 = vmatprep.subr.bf16.mxu0 %v415
        %479 = vmatpush1.bf16.msra.mxu0 %v414
        %480 = vmatprep.subr.bf16.mxu0 %v417
        %481 = vmatpush1.bf16.msra.mxu0 %v416
        %482 = vmatprep.subr.bf16.mxu0 %v419
        %483 = vmatpush1.bf16.msra.mxu0 %v418
        %484 = vmatprep.subr.bf16.mxu0 %v421
        %485 = vmatpush1.bf16.msra.mxu0 %v420
        %486 = vmatprep.subr.bf16.mxu0 %v423
        %487 = vmatpush1.bf16.msra.mxu0 %v422
        %488 = vmatprep.subr.bf16.mxu0 %v425
        %489 = vmatpush1.bf16.msra.mxu0 %v424
        %490 = vmatprep.subr.bf16.mxu0 %v427
        %491 = vmatpush1.bf16.msra.mxu0 %v426
        %492 = vmatprep.subr.bf16.mxu0 %v429
        %493 = vmatpush1.bf16.msra.mxu0 %v428
        %494 = vmatprep.subr.bf16.mxu0 %v431
        %495 = vmatpush1.bf16.msra.mxu0 %v430
        %496 = vmatprep.subr.bf16.mxu0 %v433
        %497 = vmatpush1.bf16.msra.mxu0 %v432
        %498 = vmatprep.subr.bf16.mxu0 %v435
        %499 = vmatpush1.bf16.msra.mxu0 %v434
        %500 = vmatprep.subr.bf16.mxu0 %v437
        %501 = vmatpush1.bf16.msra.mxu0 %v436
        %502 = vmatprep.subr.bf16.mxu0 %v439
        %503 = vmatpush1.bf16.msra.mxu0 %v438
        %504 = vmatprep.subr.bf16.mxu0 %v441
        %505 = vmatpush1.bf16.msra.mxu0 %v440
        %506 = vmatprep.subr.bf16.mxu0 %v443
        %507 = vmatpush1.bf16.msra.mxu0 %v442
        %508 = vmatprep.subr.bf16.mxu0 %v445
        %509 = vmatpush1.bf16.msra.mxu0 %v444
        %510 = vmatprep.mubr.bf16.mxu0 %v279
        %511 = vmatmul.mubr.bf16.gmra.mrb[0].mxu0 %v278
        %v512 = vpop.f32.mrb[0].mxu0
        %v513 = vadd.f32 %v316, %v512
        %v514 = vpop.f32.mrb[0].mxu0
        %v515 = vadd.f32 %v316, %v514
        %v516 = vpop.f32.mrb[0].mxu0
        %v517 = vpop.f32.mrb[0].mxu0
        %518 = vdwg.mxu0
        %519 = vst [vmem:[%s205] sm:$0xff] %v513
        %520 = vst [vmem:[%s205 + $0x8] sm:$0xff] %v515
        %s521 = sand.u32 %s116, 1
        %s522 = scalar_lea.sflag [#allocation4], %s521
        %s523 = sand.u32 %s116, 1
        %s524 = smul.addr %s523, 16
        %s525 = scalar_lea.vmem [#allocation5], %s524
        // Predicated region
        $region41: #{tpu_custom_call.1} parent=35 // pred_check
          %p526 = pneg %p126
        $region42: #{tpu_custom_call.1} parent=35 // pred_check_branch
          %528 = sbr.rel (%p526) target = $region44
        $region43: #{tpu_custom_call.1} parent=35 // pred_region
          %s530 = ssub.s32 256, 256
          %531 = vsyncadd %s522, %s530
          %s532 = smul.addr %s19, 2
          %s533 = smul.addr %s532, 128
          %s534 = scalar_lea.hbm %s4, %s533
          %s536 = sshll.u32 %s525, 4
          %s537 = int_to_ptr.vmem [resolvable:$true] %s536
          %539 = dma.vmem_to_hbm [thread:$0]  %s537, 256, %s534, %s522
        $region44: #{tpu_custom_call.1} parent=35 // pred_fallthru
          _
      $region36: #{tpu_custom_call.1} parent=5 // pred_fallthru
        _
      %p540 = scmp.le.s32.totalorder 2, %s14
      // Predicated region
      $region45: #{tpu_custom_call.1} parent=5 // pred_check
        %p541 = pneg %p540
      $region46: #{tpu_custom_call.1} parent=5 // pred_check_branch
        %543 = sbr.rel (%p541) target = $region48
      $region47: #{tpu_custom_call.1} parent=5 // pred_region
        %s544 = ssub.s32 %s14, 2
        // Predicated region
        $region49: #{tpu_custom_call.1} parent=47 // pred_check
          %p545 = pneg %p132
        $region50: #{tpu_custom_call.1} parent=47 // pred_check_branch
          %547 = sbr.rel (%p545) target = $region52
        $region51: #{tpu_custom_call.1} parent=47 // pred_region
          %s548 = sand.u32 %s117, 1
          %s549 = scalar_lea.sflag [#allocation4], %s548
          %s550 = sand.u32 %s117, 1
          %s551 = smul.addr %s550, 16
          %s552 = scalar_lea.vmem [#allocation5], %s551
          %553 = dma.done %s549, 256
        $region52: #{tpu_custom_call.1} parent=47 // pred_fallthru
          _
      $region48: #{tpu_custom_call.1} parent=5 // pred_fallthru
        _
    $region6: #{tpu_custom_call.1} parent=1 // loop_footer
      %s18 = sadd.s32 1, %s14
    $region7: #{tpu_custom_call.1} parent=1 // loop_footer_branch
      %13 = sbr.rel target = $region3
    $region8: #{tpu_custom_call.1} parent=1 // loop_exit
      _
    %554 = vsyncpa [#allocation3], 1
    %s555 = scalar_lea.sflag [#allocation3], 1
    %556 = vsyncpa %s555, 1
    %557 = vsyncpa [#allocation4], 1
    %s558 = scalar_lea.sflag [#allocation4], 1
    %559 = vsyncpa %s558, 1

</llo_original>
